<compile_context>
chip_gen: v7x
topology: tpu7x:2x2x1
jax: 0.10.0
libtpu: 0.0.40
codegen_flags: <defaults>
</compile_context>

<pallas_src>
import jax
import jax.numpy as jnp
from jax.experimental import pallas as pl
from jax.experimental.pallas import tpu as pltpu

LANE = 128
# Conservative double-buffered working-set budget (fits the default scoped
# VMEM on every generation: 16 MiB v5e, 32 MiB v6e/v7x).
_VMEM_BUDGET_BYTES = 16 * 1024 * 1024


def _round_up(x, m):
    return ((x + m - 1) // m) * m


def make_mtp_kernel(n_modes: int, out_feats: int, out_padded: int):
    """Folded linear + masked softmax over the trailing n_modes real columns."""
    mode_start = out_feats - n_modes

    def mtp_kernel(x_ref, w_ref, b_ref, o_ref):
        # Single MXU pass (bf16 inputs, f32 accumulate) + bias in f32.
        y = jnp.dot(x_ref[...], w_ref[...],
                    preferred_element_type=jnp.float32) + b_ref[...]

        # Bounded lane mask: only the real mode-logit columns enter the
        # softmax; the zero-padded columns [out_feats, out_padded) do not.
        col = jax.lax.broadcasted_iota(jnp.int32, (1, out_padded), 1)
        is_mode = (col >= mode_start) & (col < out_feats)

        neg_inf = jnp.float32(-jnp.inf)
        ym = jnp.where(is_mode, y, neg_inf)
        m = jnp.max(ym, axis=1, keepdims=True)
        e = jnp.exp(ym - m)                            # exp(-inf) == 0
        denom = jnp.sum(e, axis=1, keepdims=True)
        probs = e * pl.reciprocal(denom, approx=True)  # EUP vrcp

        # Trajectory (and padded) columns pass through; mode columns -> probs.
        # Full (tm, out_padded) store: lane-dense, no vst.msk partial stores.
        o_ref[...] = jnp.where(is_mode, probs, y).astype(o_ref.dtype)

    return mtp_kernel


def make_mtp_forward(w1, b1, w2, b2, n_modes: int, *, tm: int = 1024,
                     use_bf16: bool = True):
    """Fold fc1/fc2 once (weight-load time) and return a jitted forward(x).

    w1: [in, hidden], b1: [hidden], w2: [hidden, out], b2: [out]
    (nn.Linear weights pre-transposed to [in, out]).
    """
    in_feats = w1.shape[0]
    out_feats = w2.shape[1]
    out_padded = _round_up(out_feats, LANE)

    # Exact fold: y = x @ (W1 @ W2) + (b1 @ W2 + b2).  Done once, not per call.
    w = jnp.dot(w1, w2, preferred_element_type=jnp.float32)              # [in, out]
    b = (jnp.dot(b1[None, :], w2, preferred_element_type=jnp.float32)
         + b2[None, :]).astype(jnp.float32)                              # [1, out]
    # Zero-pad output columns to a lane-dense 128-multiple slab.
    w = jnp.pad(w, ((0, 0), (0, out_padded - out_feats)))
    b = jnp.pad(b, ((0, 0), (0, out_padded - out_feats)))

    mm_dtype = jnp.bfloat16 if use_bf16 else jnp.float32
    w_mm = w.astype(mm_dtype)
    row_align = 16 if mm_dtype == jnp.bfloat16 else 8

    kernel = make_mtp_kernel(n_modes, out_feats, out_padded)

    @jax.jit
    def forward(x):
        B = x.shape[0]
        out_dtype = x.dtype                      # keep f32 out; bf16 is a v5e option
        x_mm = x.astype(mm_dtype)

        # ---- row-tile selection (trace-time; B is static under jit) ----
        bytes_per_row = (in_feats * x_mm.dtype.itemsize
                         + out_padded * jnp.dtype(out_dtype).itemsize)
        tm_cap = max(row_align,
                     (_VMEM_BUDGET_BYTES // (2 * bytes_per_row))
                     // row_align * row_align)
        tile = min(tm, tm_cap)
        if B <= 2 * tile:
            # Small batch: ~two tiles so ("parallel",) feeds both v7x cores.
            tile = _round_up(max(1, pl.cdiv(B, 2)), row_align)
        tile = max(row_align, min(tile, tm_cap))
        grid_m = pl.cdiv(B, tile)

        # No jnp.pad of x: the op is row-independent, so the padded rows of a
        # non-divisible last tile compute garbage that is never stored.
        out = pl.pallas_call(
            kernel,
            out_shape=jax.ShapeDtypeStruct((B, out_padded), out_dtype),
            grid_spec=pltpu.PrefetchScalarGridSpec(
                num_scalar_prefetch=0,
                grid=(grid_m,),
                in_specs=[
                    # x streams through the auto pipeline, one row tile/step.
                    pl.BlockSpec((tile, in_feats), lambda i: (i, 0)),
                    # Folded weight / bias: constant block index -> stay
                    # VMEM-resident, no re-DMA per grid step.
                    pl.BlockSpec((in_feats, out_padded), lambda i: (0, 0)),
                    pl.BlockSpec((1, out_padded), lambda i: (0, 0)),
                ],
                out_specs=pl.BlockSpec((tile, out_padded), lambda i: (i, 0)),
            ),
            compiler_params=pltpu.CompilerParams(
                dimension_semantics=("parallel",)),
        )(x_mm, w_mm, b)

        # Drop the zero-padded columns outside the kernel.
        return out[:, :out_feats]

    return forward


def mtp_reference(x, w1, b1, w2, b2, n_modes: int):
    y = jnp.dot(jnp.dot(x, w1) + b1, w2) + b2
    traj = y[:, : y.shape[1] - n_modes]
    probs = jax.nn.softmax(y[:, y.shape[1] - n_modes:], axis=1)
    return jnp.concatenate([traj, probs], axis=1)


if __name__ == "__main__":
    # Small shapes consistent with MTP(in_feats, n_modes=3, path_len, hidden),
    # with enough rows to exercise the tiled / multi-grid-step path.
    batch = 512
    in_feats = 32
    hidden_feats = 128
    n_modes = 3
    path_len = 8
    out_feats = n_modes * (path_len * 2) + n_modes  # 51

    key = jax.random.PRNGKey(0)
    kx, k1, k2, k3, k4 = jax.random.split(key, 5)

    x = jax.random.normal(kx, (batch, in_feats), dtype=jnp.float32)
    # Synthetic nn.Linear parameters, already transposed to [in, out].
    w1 = jax.random.normal(k1, (in_feats, hidden_feats), dtype=jnp.float32) * 0.05
    b1 = jax.random.normal(k2, (hidden_feats,), dtype=jnp.float32) * 0.05
    w2 = jax.random.normal(k3, (hidden_feats, out_feats), dtype=jnp.float32) * 0.05
    b2 = jax.random.normal(k4, (out_feats,), dtype=jnp.float32) * 0.05

    mtp = make_mtp_forward(w1, b1, w2, b2, n_modes)   # fold happens once here
    out = mtp(x)
    out = jax.block_until_ready(out)

    ref = mtp_reference(x, w1, b1, w2, b2, n_modes)
    assert out.shape == (batch, out_feats), out.shape
    # bf16 MXU inputs (f32 accumulate) + approx reciprocal -> ~1e-2 tolerance.
    assert jnp.allclose(out, ref, atol=1e-2, rtol=1e-2), "mismatch vs reference"
    # Mode probabilities should sum to ~1 per row.
    assert jnp.allclose(jnp.sum(out[:, -n_modes:], axis=1), 1.0, atol=1e-2)

    print("KERNEL_OK")
</pallas_src>

<mosaic_0001>
module attributes {stable_mosaic.version = 11 : i64} {
  func.func @mtp_kernel(%arg0: i32, %arg1: memref<256x32xbf16, #tpu.memory_space<vmem>>, %arg2: memref<32x128xbf16, #tpu.memory_space<vmem>>, %arg3: memref<1x128xf32, #tpu.memory_space<vmem>>, %arg4: memref<256x128xf32, #tpu.memory_space<vmem>>) attributes {dimension_semantics = [#tpu.dimension_semantics<parallel>], iteration_bounds = array<i64: 2>, scalar_prefetch = 0 : i64, scratch_operands = 0 : i64, tpu.core_type = #tpu.core_type<tc>, window_params = [{transform_indices = @transform_0, window_bounds = array<i64: 256, 32>}, {pipeline_mode = #tpu.pipeline_mode<synchronous>, transform_indices = @transform_1, window_bounds = array<i64: 32, 128>}, {pipeline_mode = #tpu.pipeline_mode<synchronous>, transform_indices = @transform_2, window_bounds = array<i64: 1, 128>}, {transform_indices = @transform_3, window_bounds = array<i64: 256, 128>}]} {
    %c0 = arith.constant 0 : index
    %c0_0 = arith.constant 0 : index
    %0 = vector.load %arg1[%c0, %c0_0] : memref<256x32xbf16, #tpu.memory_space<vmem>>, vector<256x32xbf16>
    %c0_1 = arith.constant 0 : index
    %c0_2 = arith.constant 0 : index
    %1 = vector.load %arg2[%c0_1, %c0_2] : memref<32x128xbf16, #tpu.memory_space<vmem>>, vector<32x128xbf16>
    %cst = arith.constant dense<0.000000e+00> : vector<256x128xf32>
    %2 = tpu.matmul %0, %1, %cst {dimension_numbers = #tpu.dot_dimension_numbers<[1], [0], [0], [1], [0, 0, 1, 1], [], []>} : vector<256x32xbf16>, vector<32x128xbf16>, vector<256x128xf32> -> vector<256x128xf32>
    %c0_3 = arith.constant 0 : index
    %c0_4 = arith.constant 0 : index
    %3 = vector.load %arg3[%c0_3, %c0_4] : memref<1x128xf32, #tpu.memory_space<vmem>>, vector<1x128xf32>
    %4 = vector.broadcast %3 : vector<1x128xf32> to vector<256x128xf32>
    %5 = arith.addf %2, %4 : vector<256x128xf32>
    %6 = tpu.iota {dimensions = array<i32: 1>} : vector<1x128xi32>
    %c48_i32 = arith.constant 48 : i32
    %7 = vector.broadcast %c48_i32 : i32 to vector<1x128xi32>
    %8 = arith.cmpi sge, %6, %7 : vector<1x128xi32>
    %c51_i32 = arith.constant 51 : i32
    %9 = vector.broadcast %c51_i32 : i32 to vector<1x128xi32>
    %10 = arith.cmpi slt, %6, %9 : vector<1x128xi32>
    %11 = arith.andi %8, %10 : vector<1x128xi1>
    %cst_5 = arith.constant 0xFF800000 : f32
    %12 = vector.shape_cast %11 : vector<1x128xi1> to vector<1x128xi1>
    %13 = vector.broadcast %12 : vector<1x128xi1> to vector<256x128xi1>
    %14 = vector.broadcast %cst_5 : f32 to vector<256x128xf32>
    %15 = arith.select %13, %5, %14 : vector<256x128xi1>, vector<256x128xf32>
    %cst_6 = arith.constant dense<0xFF800000> : vector<256xf32>
    %16 = vector.multi_reduction <maximumf>, %15, %cst_6 [1] : vector<256x128xf32> to vector<256xf32>
    %17 = vector.shape_cast %16 : vector<256xf32> to vector<256x1xf32>
    %18 = vector.broadcast %17 : vector<256x1xf32> to vector<256x128xf32>
    %19 = arith.subf %15, %18 : vector<256x128xf32>
    %20 = math.exp %19 : vector<256x128xf32>
    %cst_7 = arith.constant dense<0.000000e+00> : vector<256xf32>
    %21 = vector.multi_reduction <add>, %20, %cst_7 [1] : vector<256x128xf32> to vector<256xf32>
    %22 = vector.shape_cast %21 : vector<256xf32> to vector<256x1xf32>
    %23 = tpu.reciprocal %22 {approx = true} : vector<256x1xf32> -> vector<256x1xf32>
    %24 = vector.broadcast %23 : vector<256x1xf32> to vector<256x128xf32>
    %25 = arith.mulf %20, %24 : vector<256x128xf32>
    %26 = vector.shape_cast %11 : vector<1x128xi1> to vector<1x128xi1>
    %27 = vector.broadcast %26 : vector<1x128xi1> to vector<256x128xi1>
    %28 = arith.select %27, %25, %5 : vector<256x128xi1>, vector<256x128xf32>
    %c0_8 = arith.constant 0 : index
    %c0_9 = arith.constant 0 : index
    %29 = vector.load %arg4[%c0_8, %c0_9] : memref<256x128xf32, #tpu.memory_space<vmem>>, vector<256x128xf32>
    tpu.vector_store %arg4[%c0_8, %c0_9], %28 {strides = array<i32>} : memref<256x128xf32, #tpu.memory_space<vmem>>, vector<256x128xf32>,
    return
  }
  func.func @transform_0(%arg0: i32) -> (i32, i32) {
    %c0_i32 = arith.constant 0 : i32
    %c0_i32_0 = arith.constant 0 : i32
    return %arg0, %c0_i32 : i32, i32
  }
  func.func @transform_1(%arg0: i32) -> (i32, i32) {
    %c0_i32 = arith.constant 0 : i32
    %c0_i32_0 = arith.constant 0 : i32
    %c0_i32_1 = arith.constant 0 : i32
    return %c0_i32, %c0_i32_0 : i32, i32
  }
  func.func @transform_2(%arg0: i32) -> (i32, i32) {
    %c0_i32 = arith.constant 0 : i32
    %c0_i32_0 = arith.constant 0 : i32
    %c0_i32_1 = arith.constant 0 : i32
    return %c0_i32, %c0_i32_0 : i32, i32
  }
  func.func @transform_3(%arg0: i32) -> (i32, i32) {
    %c0_i32 = arith.constant 0 : i32
    %c0_i32_0 = arith.constant 0 : i32
    return %arg0, %c0_i32 : i32, i32
  }
}

</mosaic_0001>

<llo_original>
// kernel: forward.1
$region0: #{forward.1}
  #allocation0 [shape = 'u32[]', space=smem, size = 0x4, offset = 0x4, fixed_abs, tag = 'smem constant byte address 0x4 - core index']
  #allocation1 [shape = 'u32[144,128]{1,0:T(1,128)}', space=vmem, size = 0x12000, scoped, tag = 'internal scratch']
  %s0 = inlined_call_operand.vmem [shape: bf16[512,32], index: 0, kind: input, shape index: {}]
  %s1 = inlined_call_operand.vmem [shape: bf16[32,128], index: 1, kind: input, shape index: {}]
  %s2 = inlined_call_operand.vmem [shape: f32[1,128], index: 2, kind: input, shape index: {}]
  %s3 = inlined_call_operand.vmem [shape: f32[512,128], index: 3, kind: output, shape index: {}]
  %s4 = sld [smem:[#allocation0]]
  $region45: #{forward.1} parent=0
    _
  %s6 = ssub.s32 1, %s4
  %s7 = scalar_select 0, %s6, %s4
  loop: start=0, step=1, limit=4
  $region2: #{forward.1} parent=0 // loop_pre_header
    _
  $region3: #{forward.1} parent=0 // loop_header
    %s9 = sphi 0, %s13
    %p10 = scmp.ge.s32.totalorder %s9, 4
    %s19 = sphi 0, %s21
    %s22 = sphi 0, %s19
    %s23 = sphi 0, %s22
    %s39 = sphi 0, %s23
    %s43 = sphi 0, %s43
    %s45 = sphi 0, %s43
    %s46 = sphi 0, %s45
    %s60 = sphi 0, %s46
    %s64 = sphi 0, %s64
    %s66 = sphi 0, %s64
    %s67 = sphi 0, %s66
    %s81 = sphi 0, %s67
    %s87 = sphi 0, %s89
    %s90 = sphi 0, %s87
    %s91 = sphi 0, %s90
    %s107 = sphi 0, %s91
  $region4: #{forward.1} parent=0 // loop_header_branch
    %12 = sbr.rel (%p10) target = $region8
  $region5: #{forward.1} parent=0 // loop_body
    %s14 = ssub.s32 %s9, 1
    %s15 = ssub.s32 %s9, 2
    %s16 = sadd.s32 %s9, 1
    %s17 = ssub.s32 %s9, %s16
    %p18 = scmp.eq.s32.totalorder %s17, 0
    %s20 = sadd.s32 %s19, 1
    %s21 = scalar_select %p18, %s19, %s20
    %p24 = pneg %p18
    %p25 = scmp.eq.s32.totalorder %s9, 1
    %p26 = por %p24, %p25
    %p27 = scmp.ne.s32.totalorder %s19, %s22
    %p28 = scmp.eq.s32.totalorder %s9, 0
    %p29 = por %p27, %p28
    %p30 = scmp.ne.s32.totalorder %s19, %s22
    %p31 = scmp.eq.s32.totalorder %s14, 1
    %p32 = por %p30, %p31
    %p33 = scmp.ne.s32.totalorder %s22, %s23
    %p34 = scmp.eq.s32.totalorder %s14, 0
    %p35 = por %p33, %p34
    %p36 = scmp.ne.s32.totalorder %s22, %s23
    %p37 = scmp.eq.s32.totalorder %s15, 1
    %p38 = por %p36, %p37
    %p40 = scmp.ne.s32.totalorder %s23, %s39
    %p41 = scmp.eq.s32.totalorder %s15, 0
    %p42 = por %p40, %p41
    %s44 = sadd.s32 %s43, 1
    %p47 = scmp.eq.s32.totalorder %s9, 1
    %p48 = scmp.ne.s32.totalorder %s43, %s45
    %p49 = scmp.eq.s32.totalorder %s9, 0
    %p50 = por %p48, %p49
    %p51 = scmp.ne.s32.totalorder %s43, %s45
    %p52 = scmp.eq.s32.totalorder %s14, 1
    %p53 = por %p51, %p52
    %p54 = scmp.ne.s32.totalorder %s45, %s46
    %p55 = scmp.eq.s32.totalorder %s14, 0
    %p56 = por %p54, %p55
    %p57 = scmp.ne.s32.totalorder %s45, %s46
    %p58 = scmp.eq.s32.totalorder %s15, 1
    %p59 = por %p57, %p58
    %p61 = scmp.ne.s32.totalorder %s46, %s60
    %p62 = scmp.eq.s32.totalorder %s15, 0
    %p63 = por %p61, %p62
    %s65 = sadd.s32 %s64, 1
    %p68 = scmp.eq.s32.totalorder %s9, 1
    %p69 = scmp.ne.s32.totalorder %s64, %s66
    %p70 = scmp.eq.s32.totalorder %s9, 0
    %p71 = por %p69, %p70
    %p72 = scmp.ne.s32.totalorder %s64, %s66
    %p73 = scmp.eq.s32.totalorder %s14, 1
    %p74 = por %p72, %p73
    %p75 = scmp.ne.s32.totalorder %s66, %s67
    %p76 = scmp.eq.s32.totalorder %s14, 0
    %p77 = por %p75, %p76
    %p78 = scmp.ne.s32.totalorder %s66, %s67
    %p79 = scmp.eq.s32.totalorder %s15, 1
    %p80 = por %p78, %p79
    %p82 = scmp.ne.s32.totalorder %s67, %s81
    %p83 = scmp.eq.s32.totalorder %s15, 0
    %p84 = por %p82, %p83
    %s85 = ssub.s32 %s9, %s16
    %p86 = scmp.eq.s32.totalorder %s85, 0
    %s88 = sadd.s32 %s87, 1
    %s89 = scalar_select %p86, %s87, %s88
    %p92 = pneg %p86
    %p93 = scmp.eq.s32.totalorder %s9, 1
    %p94 = por %p92, %p93
    %p95 = scmp.ne.s32.totalorder %s87, %s90
    %p96 = scmp.eq.s32.totalorder %s9, 0
    %p97 = por %p95, %p96
    %p98 = scmp.ne.s32.totalorder %s87, %s90
    %p99 = scmp.eq.s32.totalorder %s14, 1
    %p100 = por %p98, %p99
    %p101 = scmp.ne.s32.totalorder %s90, %s91
    %p102 = scmp.eq.s32.totalorder %s14, 0
    %p103 = por %p101, %p102
    %p104 = scmp.ne.s32.totalorder %s90, %s91
    %p105 = scmp.eq.s32.totalorder %s15, 1
    %p106 = por %p104, %p105
    %p108 = scmp.ne.s32.totalorder %s91, %s107
    %p109 = scmp.eq.s32.totalorder %s15, 0
    %p110 = por %p108, %p109
    %p111 = scmp.le.s32.totalorder 1, %s9
    %p112 = scmp.lt.s32.totalorder %s9, 3
    %p113 = pnand %p111, %p112
    %p114 = pneg %p113
    // Predicated region
    $region9: #{forward.1} parent=5 // pred_check
      _
    $region10: #{forward.1} parent=5 // pred_check_branch
      %116 = sbr.rel (%p113) target = $region12
    $region11: #{forward.1} parent=5 // pred_region
      %s117 = ssub.s32 %s9, 1
      // Predicated region
      $region13: #{forward.1} parent=11 // pred_check
        %p118 = pneg %p56
      $region14: #{forward.1} parent=11 // pred_check_branch
        %120 = sbr.rel (%p118) target = $region16
      $region15: #{forward.1} parent=11 // pred_region
        _
      $region16: #{forward.1} parent=11 // pred_fallthru
        _
      // Predicated region
      $region17: #{forward.1} parent=11 // pred_check
        %p121 = pneg %p77
      $region18: #{forward.1} parent=11 // pred_check_branch
        %123 = sbr.rel (%p121) target = $region20
      $region19: #{forward.1} parent=11 // pred_region
        _
      $region20: #{forward.1} parent=11 // pred_fallthru
        _
    $region12: #{forward.1} parent=5 // pred_fallthru
      _
    %p124 = scmp.lt.s32.totalorder %s9, 2
    // Predicated region
    $region21: #{forward.1} parent=5 // pred_check
      %p125 = pneg %p124
    $region22: #{forward.1} parent=5 // pred_check_branch
      %127 = sbr.rel (%p125) target = $region24
    $region23: #{forward.1} parent=5 // pred_region
      // Predicated region
      $region25: #{forward.1} parent=23 // pred_check
        %p128 = pneg %p29
      $region26: #{forward.1} parent=23 // pred_check_branch
        %130 = sbr.rel (%p128) target = $region28
      $region27: #{forward.1} parent=23 // pred_region
        %s131 = smul.u32 32, %s9
        %p132 = scmp.lt.s32.totalorder %s131, 63
        %s133 = scalar_select %p132, %s131, 63
        %s134 = smul.addr %s133, 4
        %s135 = scalar_lea.vmem %s0, %s134
        %s136 = smul.u32 32, %s9
      $region28: #{forward.1} parent=23 // pred_fallthru
        _
    $region24: #{forward.1} parent=5 // pred_fallthru
      _
    %p137 = scmp.le.s32.totalorder 1, %s9
    %p138 = scmp.lt.s32.totalorder %s9, 3
    %p139 = pnand %p137, %p138
    %p140 = pneg %p139
    // Predicated region
    $region29: #{forward.1} parent=5 // pred_check
      _
    $region30: #{forward.1} parent=5 // pred_check_branch
      %142 = sbr.rel (%p139) target = $region32
    $region31: #{forward.1} parent=5 // pred_region
      %s143 = ssub.s32 %s9, 1
      %s144 = smul.u32 32, %s14
      %p145 = scmp.lt.s32.totalorder %s144, 63
      %s146 = scalar_select %p145, %s144, 63
      %s147 = smul.addr %s146, 4
      %s148 = scalar_lea.vmem %s0, %s147
      %p149 = pneg %p35
      %p150 = pneg %p32
      %p151 = pneg %p56
      %p152 = pneg %p53
      %p153 = pneg %p77
      %p154 = pneg %p74
      %p155 = pneg %p103
      %p156 = pneg %p100
      %s157 = smul.u32 32, %s14
      %p158 = scmp.lt.s32.totalorder %s157, 63
      %s159 = scalar_select %p158, %s157, 63
      %s160 = smul.addr %s159, 8
      %s161 = scalar_lea.vmem %s3, %s160
      %s162 = smul.u32 32, %s14
      %p163 = scmp.lt.s32.totalorder %s162, 63
      %s164 = scalar_select %p163, %s162, 63
      %s165 = smul.addr %s164, 4
      %s166 = scalar_lea.vmem %s0, %s165
      %s167 = smul.u32 32, %s14
      %s168 = smul.u32 32, %s14
      %p169 = scmp.lt.s32.totalorder %s168, 63
      %s170 = scalar_select %p169, %s168, 63
      %s171 = smul.addr %s170, 8
      %s172 = scalar_lea.vmem %s3, %s171
      %s173 = smul.u32 32, %s14
      %v175 = vld [vmem:[%s166] sm:$0xf]
      %v176 = vld [vmem:[%s166 + $0x4] sm:$0xf]
      %v177 = vld [vmem:[%s166 + $0x8] sm:$0xf]
      %v178 = vld [vmem:[%s166 + $0xc] sm:$0xf]
      %v179 = vld [vmem:[%s166 + $0x10] sm:$0xf]
      %v180 = vld [vmem:[%s166 + $0x14] sm:$0xf]
      %v181 = vld [vmem:[%s166 + $0x18] sm:$0xf]
      %v182 = vld [vmem:[%s166 + $0x1c] sm:$0xf]
      %v183 = vld [vmem:[%s166 + $0x20] sm:$0xf]
      %v184 = vld [vmem:[%s166 + $0x24] sm:$0xf]
      %v185 = vld [vmem:[%s166 + $0x28] sm:$0xf]
      %v186 = vld [vmem:[%s166 + $0x2c] sm:$0xf]
      %v187 = vld [vmem:[%s166 + $0x30] sm:$0xf]
      %v188 = vld [vmem:[%s166 + $0x34] sm:$0xf]
      %v189 = vld [vmem:[%s166 + $0x38] sm:$0xf]
      %v190 = vld [vmem:[%s166 + $0x3c] sm:$0xf]
      %v191 = vld [vmem:[%s166 + $0x40] sm:$0xf]
      %v192 = vld [vmem:[%s166 + $0x44] sm:$0xf]
      %v193 = vld [vmem:[%s166 + $0x48] sm:$0xf]
      %v194 = vld [vmem:[%s166 + $0x4c] sm:$0xf]
      %v195 = vld [vmem:[%s166 + $0x50] sm:$0xf]
      %v196 = vld [vmem:[%s166 + $0x54] sm:$0xf]
      %v197 = vld [vmem:[%s166 + $0x58] sm:$0xf]
      %v198 = vld [vmem:[%s166 + $0x5c] sm:$0xf]
      %v199 = vld [vmem:[%s166 + $0x60] sm:$0xf]
      %v200 = vld [vmem:[%s166 + $0x64] sm:$0xf]
      %v201 = vld [vmem:[%s166 + $0x68] sm:$0xf]
      %v202 = vld [vmem:[%s166 + $0x6c] sm:$0xf]
      %v203 = vld [vmem:[%s166 + $0x70] sm:$0xf]
      %v204 = vld [vmem:[%s166 + $0x74] sm:$0xf]
      %v205 = vld [vmem:[%s166 + $0x78] sm:$0xf]
      %v206 = vld [vmem:[%s166 + $0x7c] sm:$0xf]
      %v207 = vld [vmem:[%s1] sm:$0xf]
      %v208 = vld [vmem:[%s1 + $0x4] sm:$0xf]
      %v209 = vld [vmem:[%s1 + $0x8] sm:$0xf]
      %v210 = vld [vmem:[%s1 + $0xc] sm:$0xf]
      %v211 = vld [vmem:[%s2] sm:$0x1]
      %v213 = vlaneseq
      %v214 = vshrl.u32 %v213, 7
      %v215 = vsub.s32 0, %v214
      %v216 = vrot.slane %v211, %v215
      %v250 = vunpack.c.l.b16 %v175
      %v251 = vunpack.c.l.b16 %v176
      %v252 = vunpack.c.l.b16 %v177
      %v253 = vunpack.c.l.b16 %v178
      %v254 = vunpack.c.l.b16 %v179
      %v255 = vunpack.c.l.b16 %v180
      %v256 = vunpack.c.l.b16 %v181
      %v257 = vunpack.c.l.b16 %v182
      %v258 = vunpack.c.l.b16 %v183
      %v259 = vunpack.c.l.b16 %v184
      %v260 = vunpack.c.l.b16 %v185
      %v261 = vunpack.c.l.b16 %v186
      %v262 = vunpack.c.l.b16 %v187
      %v263 = vunpack.c.l.b16 %v188
      %v264 = vunpack.c.l.b16 %v189
      %v265 = vunpack.c.l.b16 %v190
      %v266 = vunpack.c.l.b16 %v191
      %v267 = vunpack.c.l.b16 %v192
      %v268 = vunpack.c.l.b16 %v193
      %v269 = vunpack.c.l.b16 %v194
      %v270 = vunpack.c.l.b16 %v195
      %v271 = vunpack.c.l.b16 %v196
      %v272 = vunpack.c.l.b16 %v197
      %v273 = vunpack.c.l.b16 %v198
      %v274 = vunpack.c.l.b16 %v199
      %v275 = vunpack.c.l.b16 %v200
      %v276 = vunpack.c.l.b16 %v201
      %v277 = vunpack.c.l.b16 %v202
      %v278 = vunpack.c.l.b16 %v203
      %v279 = vunpack.c.l.b16 %v204
      %v280 = vunpack.c.l.b16 %v205
      %v281 = vunpack.c.l.b16 %v206
      %v282 = vpack.c.b16 %v251, %v250
      %v283 = vpack.c.b16 %v253, %v252
      %v284 = vpack.c.b16 %v255, %v254
      %v285 = vpack.c.b16 %v257, %v256
      %v286 = vpack.c.b16 %v259, %v258
      %v287 = vpack.c.b16 %v261, %v260
      %v288 = vpack.c.b16 %v263, %v262
      %v289 = vpack.c.b16 %v265, %v264
      %v290 = vpack.c.b16 %v267, %v266
      %v291 = vpack.c.b16 %v269, %v268
      %v292 = vpack.c.b16 %v271, %v270
      %v293 = vpack.c.b16 %v273, %v272
      %v294 = vpack.c.b16 %v275, %v274
      %v295 = vpack.c.b16 %v277, %v276
      %v296 = vpack.c.b16 %v279, %v278
      %v297 = vpack.c.b16 %v281, %v280
      %v302 = vunpack.c.l.b16 %v207
      %v303 = vunpack.c.l.b16 %v208
      %v304 = vunpack.c.l.b16 %v209
      %v305 = vunpack.c.l.b16 %v210
      %v306 = vpack.c.b16 %v303, %v302
      %v307 = vpack.c.b16 %v305, %v304
      %vm310 = vcmask 261120
      %v312 = vsel %vm310, %v282, 0
      %v315 = vsel %vm310, %v283, 0
      %v318 = vsel %vm310, %v284, 0
      %v321 = vsel %vm310, %v285, 0
      %v324 = vsel %vm310, %v286, 0
      %v327 = vsel %vm310, %v287, 0
      %v330 = vsel %vm310, %v288, 0
      %v333 = vsel %vm310, %v289, 0
      %v336 = vsel %vm310, %v290, 0
      %v339 = vsel %vm310, %v291, 0
      %v342 = vsel %vm310, %v292, 0
      %v345 = vsel %vm310, %v293, 0
      %v348 = vsel %vm310, %v294, 0
      %v351 = vsel %vm310, %v295, 0
      %v354 = vsel %vm310, %v296, 0
      %v357 = vsel %vm310, %v297, 0
      %359 = vmatprep.subr.bf16.mxu0 0
      %360 = vmatpush1.bf16.msra.mxu0 %v306
      %361 = vmatprep.subr.bf16.mxu0 0
      %362 = vmatpush1.bf16.msra.mxu0 %v307
      %363 = vmatprep.subr.bf16.mxu0 0
      %364 = vmatpush1.bf16.msra.mxu0 0
      %365 = vmatprep.subr.bf16.mxu0 0
      %366 = vmatpush1.bf16.msra.mxu0 0
      %367 = vmatprep.subr.bf16.mxu0 0
      %368 = vmatpush1.bf16.msra.mxu0 0
      %369 = vmatprep.subr.bf16.mxu0 0
      %370 = vmatpush1.bf16.msra.mxu0 0
      %371 = vmatprep.subr.bf16.mxu0 0
      %372 = vmatpush1.bf16.msra.mxu0 0
      %373 = vmatprep.subr.bf16.mxu0 0
      %374 = vmatpush1.bf16.msra.mxu0 0
      %375 = vmatprep.subr.bf16.mxu0 0
      %376 = vmatpush1.bf16.msra.mxu0 0
      %377 = vmatprep.subr.bf16.mxu0 0
      %378 = vmatpush1.bf16.msra.mxu0 0
      %379 = vmatprep.subr.bf16.mxu0 0
      %380 = vmatpush1.bf16.msra.mxu0 0
      %381 = vmatprep.subr.bf16.mxu0 0
      %382 = vmatpush1.bf16.msra.mxu0 0
      %383 = vmatprep.subr.bf16.mxu0 0
      %384 = vmatpush1.bf16.msra.mxu0 0
      %385 = vmatprep.subr.bf16.mxu0 0
      %386 = vmatpush1.bf16.msra.mxu0 0
      %387 = vmatprep.subr.bf16.mxu0 0
      %388 = vmatpush1.bf16.msra.mxu0 0
      %389 = vmatprep.subr.bf16.mxu0 0
      %390 = vmatpush1.bf16.msra.mxu0 0
      %391 = vmatprep.mubr.bf16.mxu0 0
      %392 = vmatmul.mubr.bf16.gmra.mrb[0].mxu0 %v312
      %v393 = vpop.f32.mrb[0].mxu0
      %v394 = vadd.f32 %v216, %v393
      %v395 = vpop.f32.mrb[0].mxu0
      %v396 = vpop.f32.mrb[0].mxu0
      %v397 = vadd.f32 %v216, %v396
      %v398 = vpop.f32.mrb[0].mxu0
      %399 = vmatprep.mubr.bf16.mxu0 0
      %400 = vmatmul.mubr.bf16.gmra.mrb[0].mxu0 %v315
      %v401 = vpop.f32.mrb[0].mxu0
      %v402 = vadd.f32 %v216, %v401
      %v403 = vpop.f32.mrb[0].mxu0
      %v404 = vpop.f32.mrb[0].mxu0
      %v405 = vadd.f32 %v216, %v404
      %v406 = vpop.f32.mrb[0].mxu0
      %407 = vmatprep.mubr.bf16.mxu0 0
      %408 = vmatmul.mubr.bf16.gmra.mrb[0].mxu0 %v318
      %v409 = vpop.f32.mrb[0].mxu0
      %v410 = vadd.f32 %v216, %v409
      %v411 = vpop.f32.mrb[0].mxu0
      %v412 = vpop.f32.mrb[0].mxu0
      %v413 = vadd.f32 %v216, %v412
      %v414 = vpop.f32.mrb[0].mxu0
      %415 = vmatprep.mubr.bf16.mxu0 0
      %416 = vmatmul.mubr.bf16.gmra.mrb[0].mxu0 %v321
      %v417 = vpop.f32.mrb[0].mxu0
      %v418 = vadd.f32 %v216, %v417
      %v419 = vpop.f32.mrb[0].mxu0
      %v420 = vpop.f32.mrb[0].mxu0
      %v421 = vadd.f32 %v216, %v420
      %v422 = vpop.f32.mrb[0].mxu0
      %423 = vmatprep.mubr.bf16.mxu0 0
      %424 = vmatmul.mubr.bf16.gmra.mrb[0].mxu0 %v324
      %v425 = vpop.f32.mrb[0].mxu0
      %v426 = vadd.f32 %v216, %v425
      %v427 = vpop.f32.mrb[0].mxu0
      %v428 = vpop.f32.mrb[0].mxu0
      %v429 = vadd.f32 %v216, %v428
      %v430 = vpop.f32.mrb[0].mxu0
      %431 = vmatprep.mubr.bf16.mxu0 0
      %432 = vmatmul.mubr.bf16.gmra.mrb[0].mxu0 %v327
      %v433 = vpop.f32.mrb[0].mxu0
      %v434 = vadd.f32 %v216, %v433
      %v435 = vpop.f32.mrb[0].mxu0
      %v436 = vpop.f32.mrb[0].mxu0
      %v437 = vadd.f32 %v216, %v436
      %v438 = vpop.f32.mrb[0].mxu0
      %439 = vmatprep.mubr.bf16.mxu0 0
      %440 = vmatmul.mubr.bf16.gmra.mrb[0].mxu0 %v330
      %v441 = vpop.f32.mrb[0].mxu0
      %v442 = vadd.f32 %v216, %v441
      %v443 = vpop.f32.mrb[0].mxu0
      %v444 = vpop.f32.mrb[0].mxu0
      %v445 = vadd.f32 %v216, %v444
      %v446 = vpop.f32.mrb[0].mxu0
      %447 = vmatprep.mubr.bf16.mxu0 0
      %448 = vmatmul.mubr.bf16.gmra.mrb[0].mxu0 %v333
      %v449 = vpop.f32.mrb[0].mxu0
      %v450 = vadd.f32 %v216, %v449
      %v451 = vpop.f32.mrb[0].mxu0
      %v452 = vpop.f32.mrb[0].mxu0
      %v453 = vadd.f32 %v216, %v452
      %v454 = vpop.f32.mrb[0].mxu0
      %455 = vmatprep.mubr.bf16.mxu0 0
      %456 = vmatmul.mubr.bf16.gmra.mrb[0].mxu0 %v336
      %v457 = vpop.f32.mrb[0].mxu0
      %v458 = vadd.f32 %v216, %v457
      %v459 = vpop.f32.mrb[0].mxu0
      %v460 = vpop.f32.mrb[0].mxu0
      %v461 = vadd.f32 %v216, %v460
      %v462 = vpop.f32.mrb[0].mxu0
      %463 = vmatprep.mubr.bf16.mxu0 0
      %464 = vmatmul.mubr.bf16.gmra.mrb[0].mxu0 %v339
      %v465 = vpop.f32.mrb[0].mxu0
      %v466 = vadd.f32 %v216, %v465
      %v467 = vpop.f32.mrb[0].mxu0
      %v468 = vpop.f32.mrb[0].mxu0
      %v469 = vadd.f32 %v216, %v468
      %v470 = vpop.f32.mrb[0].mxu0
      %471 = vmatprep.mubr.bf16.mxu0 0
      %472 = vmatmul.mubr.bf16.gmra.mrb[0].mxu0 %v342
      %v473 = vpop.f32.mrb[0].mxu0
      %v474 = vadd.f32 %v216, %v473
      %v475 = vpop.f32.mrb[0].mxu0
      %v476 = vpop.f32.mrb[0].mxu0
      %v477 = vadd.f32 %v216, %v476
      %v478 = vpop.f32.mrb[0].mxu0
      %479 = vmatprep.mubr.bf16.mxu0 0
      %480 = vmatmul.mubr.bf16.gmra.mrb[0].mxu0 %v345
      %v481 = vpop.f32.mrb[0].mxu0
      %v482 = vadd.f32 %v216, %v481
      %v483 = vpop.f32.mrb[0].mxu0
      %v484 = vpop.f32.mrb[0].mxu0
      %v485 = vadd.f32 %v216, %v484
      %v486 = vpop.f32.mrb[0].mxu0
      %487 = vmatprep.mubr.bf16.mxu0 0
      %488 = vmatmul.mubr.bf16.gmra.mrb[0].mxu0 %v348
      %v489 = vpop.f32.mrb[0].mxu0
      %v490 = vadd.f32 %v216, %v489
      %v491 = vpop.f32.mrb[0].mxu0
      %v492 = vpop.f32.mrb[0].mxu0
      %v493 = vadd.f32 %v216, %v492
      %v494 = vpop.f32.mrb[0].mxu0
      %495 = vmatprep.mubr.bf16.mxu0 0
      %496 = vmatmul.mubr.bf16.gmra.mrb[0].mxu0 %v351
      %v497 = vpop.f32.mrb[0].mxu0
      %v498 = vadd.f32 %v216, %v497
      %v499 = vpop.f32.mrb[0].mxu0
      %v500 = vpop.f32.mrb[0].mxu0
      %v501 = vadd.f32 %v216, %v500
      %v502 = vpop.f32.mrb[0].mxu0
      %503 = vmatprep.mubr.bf16.mxu0 0
      %504 = vmatmul.mubr.bf16.gmra.mrb[0].mxu0 %v354
      %v505 = vpop.f32.mrb[0].mxu0
      %v506 = vadd.f32 %v216, %v505
      %v507 = vpop.f32.mrb[0].mxu0
      %v508 = vpop.f32.mrb[0].mxu0
      %v509 = vadd.f32 %v216, %v508
      %v510 = vpop.f32.mrb[0].mxu0
      %511 = vmatprep.mubr.bf16.mxu0 0
      %512 = vmatmul.mubr.bf16.gmra.mrb[0].mxu0 %v357
      %v513 = vpop.f32.mrb[0].mxu0
      %v514 = vadd.f32 %v216, %v513
      %v515 = vpop.f32.mrb[0].mxu0
      %v516 = vpop.f32.mrb[0].mxu0
      %v517 = vadd.f32 %v216, %v516
      %v518 = vpop.f32.mrb[0].mxu0
      %519 = vdwg.mxu0
      %v520 = vlaneseq
      %v521 = vand.u32 %v520, 127
      %vm522 = vcmp.ge.s32.totalorder %v521, 48
      %vm523 = vcmp.lt.s32.totalorder %v521, 51
      %vm524 = vmand %vm522, %vm523
      %v525 = vsel %vm524, 1, 0
      %vm526 = vcmp.eq.s32.totalorder %v525, 1
      %v527 = vsel %vm526, %v394, -inf
      %v528 = vsel %vm526, %v397, -inf
      %v529 = vsel %vm526, %v402, -inf
      %v530 = vsel %vm526, %v405, -inf
      %v531 = vsel %vm526, %v410, -inf
      %v532 = vsel %vm526, %v413, -inf
      %v533 = vsel %vm526, %v418, -inf
      %v534 = vsel %vm526, %v421, -inf
      %v535 = vsel %vm526, %v426, -inf
      %v536 = vsel %vm526, %v429, -inf
      %v537 = vsel %vm526, %v434, -inf
      %v538 = vsel %vm526, %v437, -inf
      %v539 = vsel %vm526, %v442, -inf
      %v540 = vsel %vm526, %v445, -inf
      %v541 = vsel %vm526, %v450, -inf
      %v542 = vsel %vm526, %v453, -inf
      %v543 = vsel %vm526, %v458, -inf
      %v544 = vsel %vm526, %v461, -inf
      %v545 = vsel %vm526, %v466, -inf
      %v546 = vsel %vm526, %v469, -inf
      %v547 = vsel %vm526, %v474, -inf
      %v548 = vsel %vm526, %v477, -inf
      %v549 = vsel %vm526, %v482, -inf
      %v550 = vsel %vm526, %v485, -inf
      %v551 = vsel %vm526, %v490, -inf
      %v552 = vsel %vm526, %v493, -inf
      %v553 = vsel %vm526, %v498, -inf
      %v554 = vsel %vm526, %v501, -inf
      %v555 = vsel %vm526, %v506, -inf
      %v556 = vsel %vm526, %v509, -inf
      %v557 = vsel %vm526, %v514, -inf
      %v558 = vsel %vm526, %v517, -inf
      %559 = vmax.xlane.f32.xlu0 %v527
      %v560 = vpop.xlane.xlu0 %559
      %561 = vmax.xlane.f32.xlu0 %v528
      %v562 = vpop.xlane.xlu0 %561
      %563 = vmax.xlane.f32.xlu0 %v529
      %v564 = vpop.xlane.xlu0 %563
      %565 = vmax.xlane.f32.xlu0 %v530
      %v566 = vpop.xlane.xlu0 %565
      %567 = vmax.xlane.f32.xlu0 %v531
      %v568 = vpop.xlane.xlu0 %567
      %569 = vmax.xlane.f32.xlu0 %v532
      %v570 = vpop.xlane.xlu0 %569
      %571 = vmax.xlane.f32.xlu0 %v533
      %v572 = vpop.xlane.xlu0 %571
      %573 = vmax.xlane.f32.xlu0 %v534
      %v574 = vpop.xlane.xlu0 %573
      %575 = vmax.xlane.f32.xlu0 %v535
      %v576 = vpop.xlane.xlu0 %575
      %577 = vmax.xlane.f32.xlu0 %v536
      %v578 = vpop.xlane.xlu0 %577
      %579 = vmax.xlane.f32.xlu0 %v537
      %v580 = vpop.xlane.xlu0 %579
      %581 = vmax.xlane.f32.xlu0 %v538
      %v582 = vpop.xlane.xlu0 %581
      %583 = vmax.xlane.f32.xlu0 %v539
      %v584 = vpop.xlane.xlu0 %583
      %585 = vmax.xlane.f32.xlu0 %v540
      %v586 = vpop.xlane.xlu0 %585
      %587 = vmax.xlane.f32.xlu0 %v541
      %v588 = vpop.xlane.xlu0 %587
      %589 = vmax.xlane.f32.xlu0 %v542
      %v590 = vpop.xlane.xlu0 %589
      %591 = vmax.xlane.f32.xlu0 %v543
      %v592 = vpop.xlane.xlu0 %591
      %593 = vmax.xlane.f32.xlu0 %v544
      %v594 = vpop.xlane.xlu0 %593
      %595 = vmax.xlane.f32.xlu0 %v545
      %v596 = vpop.xlane.xlu0 %595
      %597 = vmax.xlane.f32.xlu0 %v546
      %v598 = vpop.xlane.xlu0 %597
      %599 = vmax.xlane.f32.xlu0 %v547
      %v600 = vpop.xlane.xlu0 %599
      %601 = vmax.xlane.f32.xlu0 %v548
      %v602 = vpop.xlane.xlu0 %601
      %603 = vmax.xlane.f32.xlu0 %v549
      %v604 = vpop.xlane.xlu0 %603
      %605 = vmax.xlane.f32.xlu0 %v550
      %v606 = vpop.xlane.xlu0 %605
      %607 = vmax.xlane.f32.xlu0 %v551
      %v608 = vpop.xlane.xlu0 %607
      %609 = vmax.xlane.f32.xlu0 %v552
      %v610 = vpop.xlane.xlu0 %609
      %611 = vmax.xlane.f32.xlu0 %v553
      %v612 = vpop.xlane.xlu0 %611
      %613 = vmax.xlane.f32.xlu0 %v554
      %v614 = vpop.xlane.xlu0 %613
      %615 = vmax.xlane.f32.xlu0 %v555
      %v616 = vpop.xlane.xlu0 %615
      %617 = vmax.xlane.f32.xlu0 %v556
      %v618 = vpop.xlane.xlu0 %617
      %619 = vmax.xlane.f32.xlu0 %v557
      %v620 = vpop.xlane.xlu0 %619
      %621 = vmax.xlane.f32.xlu0 %v558
      %v622 = vpop.xlane.xlu0 %621
      %v623 = vsub.f32 %v527, %v560
      %v624 = vsub.f32 %v528, %v562
      %v625 = vsub.f32 %v529, %v564
      %v626 = vsub.f32 %v530, %v566
      %v627 = vsub.f32 %v531, %v568
      %v628 = vsub.f32 %v532, %v570
      %v629 = vsub.f32 %v533, %v572
      %v630 = vsub.f32 %v534, %v574
      %v631 = vsub.f32 %v535, %v576
      %v632 = vsub.f32 %v536, %v578
      %v633 = vsub.f32 %v537, %v580
      %v634 = vsub.f32 %v538, %v582
      %v635 = vsub.f32 %v539, %v584
      %v636 = vsub.f32 %v540, %v586
      %v637 = vsub.f32 %v541, %v588
      %v638 = vsub.f32 %v542, %v590
      %v639 = vsub.f32 %v543, %v592
      %v640 = vsub.f32 %v544, %v594
      %v641 = vsub.f32 %v545, %v596
      %v642 = vsub.f32 %v546, %v598
      %v643 = vsub.f32 %v547, %v600
      %v644 = vsub.f32 %v548, %v602
      %v645 = vsub.f32 %v549, %v604
      %v646 = vsub.f32 %v550, %v606
      %v647 = vsub.f32 %v551, %v608
      %v648 = vsub.f32 %v552, %v610
      %v649 = vsub.f32 %v553, %v612
      %v650 = vsub.f32 %v554, %v614
      %v651 = vsub.f32 %v555, %v616
      %v652 = vsub.f32 %v556, %v618
      %v653 = vsub.f32 %v557, %v620
      %v654 = vsub.f32 %v558, %v622
      %v655 = vmul.f32 %v623, 1.442695
      %v656 = vpow.pop %v655
      %v657 = vmul.f32 %v624, 1.442695
      %v658 = vpow.pop %v657
      %v659 = vmul.f32 %v625, 1.442695
      %v660 = vpow.pop %v659
      %v661 = vmul.f32 %v626, 1.442695
      %v662 = vpow.pop %v661
      %v663 = vmul.f32 %v627, 1.442695
      %v664 = vpow.pop %v663
      %v665 = vmul.f32 %v628, 1.442695
      %v666 = vpow.pop %v665
      %v667 = vmul.f32 %v629, 1.442695
      %v668 = vpow.pop %v667
      %v669 = vmul.f32 %v630, 1.442695
      %v670 = vpow.pop %v669
      %v671 = vmul.f32 %v631, 1.442695
      %v672 = vpow.pop %v671
      %v673 = vmul.f32 %v632, 1.442695
      %v674 = vpow.pop %v673
      %v675 = vmul.f32 %v633, 1.442695
      %v676 = vpow.pop %v675
      %v677 = vmul.f32 %v634, 1.442695
      %v678 = vpow.pop %v677
      %v679 = vmul.f32 %v635, 1.442695
      %v680 = vpow.pop %v679
      %v681 = vmul.f32 %v636, 1.442695
      %v682 = vpow.pop %v681
      %v683 = vmul.f32 %v637, 1.442695
      %v684 = vpow.pop %v683
      %v685 = vmul.f32 %v638, 1.442695
      %v686 = vpow.pop %v685
      %v687 = vmul.f32 %v639, 1.442695
      %v688 = vpow.pop %v687
      %v689 = vmul.f32 %v640, 1.442695
      %v690 = vpow.pop %v689
      %v691 = vmul.f32 %v641, 1.442695
      %v692 = vpow.pop %v691
      %v693 = vmul.f32 %v642, 1.442695
      %v694 = vpow.pop %v693
      %v695 = vmul.f32 %v643, 1.442695
      %v696 = vpow.pop %v695
      %v697 = vmul.f32 %v644, 1.442695
      %v698 = vpow.pop %v697
      %v699 = vmul.f32 %v645, 1.442695
      %v700 = vpow.pop %v699
      %v701 = vmul.f32 %v646, 1.442695
      %v702 = vpow.pop %v701
      %v703 = vmul.f32 %v647, 1.442695
      %v704 = vpow.pop %v703
      %v705 = vmul.f32 %v648, 1.442695
      %v706 = vpow.pop %v705
      %v707 = vmul.f32 %v649, 1.442695
      %v708 = vpow.pop %v707
      %v709 = vmul.f32 %v650, 1.442695
      %v710 = vpow.pop %v709
      %v711 = vmul.f32 %v651, 1.442695
      %v712 = vpow.pop %v711
      %v713 = vmul.f32 %v652, 1.442695
      %v714 = vpow.pop %v713
      %v715 = vmul.f32 %v653, 1.442695
      %v716 = vpow.pop %v715
      %v717 = vmul.f32 %v654, 1.442695
      %v718 = vpow.pop %v717
      %719 = vadd.xlane.f32.xlu0 %v656
      %v720 = vpop.xlane.xlu0 %719
      %721 = vadd.xlane.f32.xlu0 %v658
      %v722 = vpop.xlane.xlu0 %721
      %723 = vadd.xlane.f32.xlu0 %v660
      %v724 = vpop.xlane.xlu0 %723
      %725 = vadd.xlane.f32.xlu0 %v662
      %v726 = vpop.xlane.xlu0 %725
      %727 = vadd.xlane.f32.xlu0 %v664
      %v728 = vpop.xlane.xlu0 %727
      %729 = vadd.xlane.f32.xlu0 %v666
      %v730 = vpop.xlane.xlu0 %729
      %731 = vadd.xlane.f32.xlu0 %v668
      %v732 = vpop.xlane.xlu0 %731
      %733 = vadd.xlane.f32.xlu0 %v670
      %v734 = vpop.xlane.xlu0 %733
      %735 = vadd.xlane.f32.xlu0 %v672
      %v736 = vpop.xlane.xlu0 %735
      %737 = vadd.xlane.f32.xlu0 %v674
      %v738 = vpop.xlane.xlu0 %737
      %739 = vadd.xlane.f32.xlu0 %v676
      %v740 = vpop.xlane.xlu0 %739
      %741 = vadd.xlane.f32.xlu0 %v678
      %v742 = vpop.xlane.xlu0 %741
      %743 = vadd.xlane.f32.xlu0 %v680
      %v744 = vpop.xlane.xlu0 %743
      %745 = vadd.xlane.f32.xlu0 %v682
      %v746 = vpop.xlane.xlu0 %745
      %747 = vadd.xlane.f32.xlu0 %v684
      %v748 = vpop.xlane.xlu0 %747
      %749 = vadd.xlane.f32.xlu0 %v686
      %v750 = vpop.xlane.xlu0 %749
      %751 = vadd.xlane.f32.xlu0 %v688
      %v752 = vpop.xlane.xlu0 %751
      %753 = vadd.xlane.f32.xlu0 %v690
      %v754 = vpop.xlane.xlu0 %753
      %755 = vadd.xlane.f32.xlu0 %v692
      %v756 = vpop.xlane.xlu0 %755
      %757 = vadd.xlane.f32.xlu0 %v694
      %v758 = vpop.xlane.xlu0 %757
      %759 = vadd.xlane.f32.xlu0 %v696
      %v760 = vpop.xlane.xlu0 %759
      %761 = vadd.xlane.f32.xlu0 %v698
      %v762 = vpop.xlane.xlu0 %761
      %763 = vadd.xlane.f32.xlu0 %v700
      %v764 = vpop.xlane.xlu0 %763
      %765 = vadd.xlane.f32.xlu0 %v702
      %v766 = vpop.xlane.xlu0 %765
      %767 = vadd.xlane.f32.xlu0 %v704
      %v768 = vpop.xlane.xlu0 %767
      %769 = vadd.xlane.f32.xlu0 %v706
      %v770 = vpop.xlane.xlu0 %769
      %771 = vadd.xlane.f32.xlu0 %v708
      %v772 = vpop.xlane.xlu0 %771
      %773 = vadd.xlane.f32.xlu0 %v710
      %v774 = vpop.xlane.xlu0 %773
      %775 = vadd.xlane.f32.xlu0 %v712
      %v776 = vpop.xlane.xlu0 %775
      %777 = vadd.xlane.f32.xlu0 %v714
      %v778 = vpop.xlane.xlu0 %777
      %779 = vadd.xlane.f32.xlu0 %v716
      %v780 = vpop.xlane.xlu0 %779
      %781 = vadd.xlane.f32.xlu0 %v718
      %v782 = vpop.xlane.xlu0 %781
      %v783 = vrcp.pop %v720
      %v784 = vrcp.pop %v722
      %v785 = vrcp.pop %v724
      %v786 = vrcp.pop %v726
      %v787 = vrcp.pop %v728
      %v788 = vrcp.pop %v730
      %v789 = vrcp.pop %v732
      %v790 = vrcp.pop %v734
      %v791 = vrcp.pop %v736
      %v792 = vrcp.pop %v738
      %v793 = vrcp.pop %v740
      %v794 = vrcp.pop %v742
      %v795 = vrcp.pop %v744
      %v796 = vrcp.pop %v746
      %v797 = vrcp.pop %v748
      %v798 = vrcp.pop %v750
      %v799 = vrcp.pop %v752
      %v800 = vrcp.pop %v754
      %v801 = vrcp.pop %v756
      %v802 = vrcp.pop %v758
      %v803 = vrcp.pop %v760
      %v804 = vrcp.pop %v762
      %v805 = vrcp.pop %v764
      %v806 = vrcp.pop %v766
      %v807 = vrcp.pop %v768
      %v808 = vrcp.pop %v770
      %v809 = vrcp.pop %v772
      %v810 = vrcp.pop %v774
      %v811 = vrcp.pop %v776
      %v812 = vrcp.pop %v778
      %v813 = vrcp.pop %v780
      %v814 = vrcp.pop %v782
      %v815 = vmul.f32 %v656, %v783
      %v816 = vmul.f32 %v658, %v784
      %v817 = vmul.f32 %v660, %v785
      %v818 = vmul.f32 %v662, %v786
      %v819 = vmul.f32 %v664, %v787
      %v820 = vmul.f32 %v666, %v788
      %v821 = vmul.f32 %v668, %v789
      %v822 = vmul.f32 %v670, %v790
      %v823 = vmul.f32 %v672, %v791
      %v824 = vmul.f32 %v674, %v792
      %v825 = vmul.f32 %v676, %v793
      %v826 = vmul.f32 %v678, %v794
      %v827 = vmul.f32 %v680, %v795
      %v828 = vmul.f32 %v682, %v796
      %v829 = vmul.f32 %v684, %v797
      %v830 = vmul.f32 %v686, %v798
      %v831 = vmul.f32 %v688, %v799
      %v832 = vmul.f32 %v690, %v800
      %v833 = vmul.f32 %v692, %v801
      %v834 = vmul.f32 %v694, %v802
      %v835 = vmul.f32 %v696, %v803
      %v836 = vmul.f32 %v698, %v804
      %v837 = vmul.f32 %v700, %v805
      %v838 = vmul.f32 %v702, %v806
      %v839 = vmul.f32 %v704, %v807
      %v840 = vmul.f32 %v706, %v808
      %v841 = vmul.f32 %v708, %v809
      %v842 = vmul.f32 %v710, %v810
      %v843 = vmul.f32 %v712, %v811
      %v844 = vmul.f32 %v714, %v812
      %v845 = vmul.f32 %v716, %v813
      %v846 = vmul.f32 %v718, %v814
      %v847 = vsel %vm526, %v815, %v394
      %v848 = vsel %vm526, %v816, %v397
      %v849 = vsel %vm526, %v817, %v402
      %v850 = vsel %vm526, %v818, %v405
      %v851 = vsel %vm526, %v819, %v410
      %v852 = vsel %vm526, %v820, %v413
      %v853 = vsel %vm526, %v821, %v418
      %v854 = vsel %vm526, %v822, %v421
      %v855 = vsel %vm526, %v823, %v426
      %v856 = vsel %vm526, %v824, %v429
      %v857 = vsel %vm526, %v825, %v434
      %v858 = vsel %vm526, %v826, %v437
      %v859 = vsel %vm526, %v827, %v442
      %v860 = vsel %vm526, %v828, %v445
      %v861 = vsel %vm526, %v829, %v450
      %v862 = vsel %vm526, %v830, %v453
      %v863 = vsel %vm526, %v831, %v458
      %v864 = vsel %vm526, %v832, %v461
      %v865 = vsel %vm526, %v833, %v466
      %v866 = vsel %vm526, %v834, %v469
      %v867 = vsel %vm526, %v835, %v474
      %v868 = vsel %vm526, %v836, %v477
      %v869 = vsel %vm526, %v837, %v482
      %v870 = vsel %vm526, %v838, %v485
      %v871 = vsel %vm526, %v839, %v490
      %v872 = vsel %vm526, %v840, %v493
      %v873 = vsel %vm526, %v841, %v498
      %v874 = vsel %vm526, %v842, %v501
      %v875 = vsel %vm526, %v843, %v506
      %v876 = vsel %vm526, %v844, %v509
      %v877 = vsel %vm526, %v845, %v514
      %v878 = vsel %vm526, %v846, %v517
      %879 = vst [vmem:[%s172] sm:$0xff] %v847
      %880 = vst [vmem:[%s172 + $0x8] sm:$0xff] %v848
      %881 = vst [vmem:[%s172 + $0x10] sm:$0xff] %v849
      %882 = vst [vmem:[%s172 + $0x18] sm:$0xff] %v850
      %883 = vst [vmem:[%s172 + $0x20] sm:$0xff] %v851
      %884 = vst [vmem:[%s172 + $0x28] sm:$0xff] %v852
      %885 = vst [vmem:[%s172 + $0x30] sm:$0xff] %v853
      %886 = vst [vmem:[%s172 + $0x38] sm:$0xff] %v854
      %887 = vst [vmem:[%s172 + $0x40] sm:$0xff] %v855
      %888 = vst [vmem:[%s172 + $0x48] sm:$0xff] %v856
      %889 = vst [vmem:[%s172 + $0x50] sm:$0xff] %v857
      %890 = vst [vmem:[%s172 + $0x58] sm:$0xff] %v858
      %891 = vst [vmem:[%s172 + $0x60] sm:$0xff] %v859
      %892 = vst [vmem:[%s172 + $0x68] sm:$0xff] %v860
      %893 = vst [vmem:[%s172 + $0x70] sm:$0xff] %v861
      %894 = vst [vmem:[%s172 + $0x78] sm:$0xff] %v862
      %895 = vst [vmem:[%s172 + $0x80] sm:$0xff] %v863
      %896 = vst [vmem:[%s172 + $0x88] sm:$0xff] %v864
      %897 = vst [vmem:[%s172 + $0x90] sm:$0xff] %v865
      %898 = vst [vmem:[%s172 + $0x98] sm:$0xff] %v866
      %899 = vst [vmem:[%s172 + $0xa0] sm:$0xff] %v867
      %900 = vst [vmem:[%s172 + $0xa8] sm:$0xff] %v868
      %901 = vst [vmem:[%s172 + $0xb0] sm:$0xff] %v869
      %902 = vst [vmem:[%s172 + $0xb8] sm:$0xff] %v870
      %903 = vst [vmem:[%s172 + $0xc0] sm:$0xff] %v871
      %904 = vst [vmem:[%s172 + $0xc8] sm:$0xff] %v872
      %905 = vst [vmem:[%s172 + $0xd0] sm:$0xff] %v873
      %906 = vst [vmem:[%s172 + $0xd8] sm:$0xff] %v874
      %907 = vst [vmem:[%s172 + $0xe0] sm:$0xff] %v875
      %908 = vst [vmem:[%s172 + $0xe8] sm:$0xff] %v876
      %909 = vst [vmem:[%s172 + $0xf0] sm:$0xff] %v877
      %910 = vst [vmem:[%s172 + $0xf8] sm:$0xff] %v878
      %s911 = smul.u32 32, %s14
      %p912 = scmp.lt.s32.totalorder %s911, 63
      %s913 = scalar_select %p912, %s911, 63
      %s914 = smul.addr %s913, 8
      %s915 = scalar_lea.vmem %s3, %s914
      // Predicated region
      $region33: #{forward.1} parent=31 // pred_check
        %p916 = pneg %p100
      $region34: #{forward.1} parent=31 // pred_check_branch
        %918 = sbr.rel (%p916) target = $region36
      $region35: #{forward.1} parent=31 // pred_region
        %s919 = smul.u32 32, %s14
      $region36: #{forward.1} parent=31 // pred_fallthru
        _
    $region32: #{forward.1} parent=5 // pred_fallthru
      _
    %p920 = scmp.le.s32.totalorder 2, %s9
    // Predicated region
    $region37: #{forward.1} parent=5 // pred_check
      %p921 = pneg %p920
    $region38: #{forward.1} parent=5 // pred_check_branch
      %923 = sbr.rel (%p921) target = $region40
    $region39: #{forward.1} parent=5 // pred_region
      %s924 = ssub.s32 %s9, 2
      // Predicated region
      $region41: #{forward.1} parent=39 // pred_check
        %p925 = pneg %p106
      $region42: #{forward.1} parent=39 // pred_check_branch
        %927 = sbr.rel (%p925) target = $region44
      $region43: #{forward.1} parent=39 // pred_region
        %s928 = smul.u32 32, %s15
        %p929 = scmp.lt.s32.totalorder %s928, 63
        %s930 = scalar_select %p929, %s928, 63
        %s931 = smul.addr %s930, 8
        %s932 = scalar_lea.vmem %s3, %s931
      $region44: #{forward.1} parent=39 // pred_fallthru
        _
    $region40: #{forward.1} parent=5 // pred_fallthru
      _
  $region6: #{forward.1} parent=0 // loop_footer
    %s13 = sadd.s32 1, %s9
  $region7: #{forward.1} parent=0 // loop_footer_branch
    %8 = sbr.rel target = $region3
  $region8: #{forward.1} parent=0 // loop_exit
    _

</llo_original>
